<compile_context>
chip_gen: v6e
topology: v6e:2x2x1
jax: 0.10.0
libtpu: 0.0.40
codegen_flags: <defaults>
</compile_context>

<pallas_src>
import functools

import numpy as np
import jax
import jax.numpy as jnp
from jax import lax
from jax.experimental import pallas as pl
from jax.experimental.pallas import tpu as pltpu


def _plan_tiles(C, H, W, mxu_itemsize):
    """Pick the output-pixel tile width T and a per-TensorCore VMEM limit."""
    HW = H * W
    try:
        cap = int(pltpu.get_tpu_info().vmem_capacity_bytes)
    except Exception:  # no query available: assume the smallest (v7x per-TC)
        cap = 64 * 1024 * 1024
    # Per-core working budget with headroom for the compiler's own scratch.
    budget = min(cap, 128 * 1024 * 1024) // 2

    # Resident image block, budgeted double-buffered (the single-buffered
    # request below only adds headroom if honored).
    img_bytes = 2 * C * H * W * mxu_itemsize
    # TODO(synk): for frames where even one (C*H, W) image block exceeds the
    # budget, chunk the x-contraction over H with a VMEM accumulator.

    # Bytes of live temporaries per output column (one lane of the tile):
    per_col = 4 * (3 * W + 3 * H)        # iotas + 2-tap one-hots over x and y
    per_col += 4 * 2 * C * H             # (C*H,T) x-contraction + (C,H,T) product
    per_col += 2 * 4 * (4 + C)           # double-buffered flow/grid/out columns
    per_col += 4 * 16                    # small (1,T) coordinate temporaries
    slack = 4 * 1024 * 1024

    if HW % 128 != 0:
        T = HW                           # tiny / odd images: one full-width tile
    else:
        t_cap = max((budget - img_bytes - slack) // per_col, 128)
        T = 0
        # Prefer multiples of 256 (v6e/v7x MXU result width); 128 also fine on v5e.
        for step in (256, 128):
            cand = (min(t_cap, HW) // step) * step
            while cand >= step and HW % cand:
                cand -= step
            if cand >= step:
                T = cand
                break
        if T == 0:
            T = HW

    est = img_bytes + per_col * T + slack
    vmem_limit = int(min(max(est, 32 * 1024 * 1024),
                         max(cap - (8 << 20), 32 << 20)))
    return T, vmem_limit


def _warp_kernel(img_ref, flow_ref, grid_ref, out_ref, *, C, H, W, flow_sign):
    """One (batch, output-pixel-tile) step of the separable bilinear gather."""
    T = out_ref.shape[2]

    u = flow_ref[0, 0:1, :]                      # (1, T) flow x
    v = flow_ref[0, 1:2, :]                      # (1, T) flow y
    gx = grid_ref[0:1, :]                        # (1, T) output-pixel x
    gy = grid_ref[1:2, :]                        # (1, T) output-pixel y

    # grid_sample(bilinear, zeros, align_corners=False) unnormalizes to
    #   forwardWarp: g - flow - 0.5      backWarp: g + flow - 0.5
    ix = gx + flow_sign * u - 0.5
    iy = gy + flow_sign * v - 0.5

    # Clamp only so the int32 cast is safe; out-of-range taps fall off the
    # [0, W) / [0, H) one-hot ranges below and contribute exactly zero.
    ix = jnp.clip(ix, -2.0, float(W + 1))
    iy = jnp.clip(iy, -2.0, float(H + 1))

    x0f = jnp.floor(ix)
    y0f = jnp.floor(iy)
    fx = ix - x0f                                # (1, T) x fraction, f32
    fy = iy - y0f                                # (1, T) y fraction, f32
    x0 = x0f.astype(jnp.int32)
    y0 = y0f.astype(jnp.int32)

    # Separable 2-tap weighted one-hots (perf-review item 1):
    #   Mx[x, p] = (1-fx)[x == x0] + fx[x == x0+1]      shape (W, T)
    #   My[y, p] = (1-fy)[y == y0] + fy[y == y0+1]      shape (H, T)
    # VALU mask work is O((H+W)*T) per tile instead of O(HW*T).
    cols = lax.broadcasted_iota(jnp.int32, (W, T), 0)
    rows = lax.broadcasted_iota(jnp.int32, (H, T), 0)
    mx = (jnp.where(cols == x0, 1.0 - fx, 0.0)
          + jnp.where(cols == x0 + 1, fx, 0.0))
    my = (jnp.where(rows == y0, 1.0 - fy, 0.0)
          + jnp.where(rows == y0 + 1, fy, 0.0))

    # x contraction on the MXU with matched operand dtypes (bf16 on the fast
    # path), f32 accumulation: (C*H, W) @ (W, T) -> (C*H, T).
    a = jnp.dot(img_ref[0], mx.astype(img_ref.dtype),
                preferred_element_type=jnp.float32)

    # y contraction: f32 weight multiply + sublane reduction over H.
    # (Reshape only regroups the sublane axis; free when H % 8 == 0.)
    out = (a.reshape(C, H, T) * my[None, :, :]).sum(axis=1)   # (C, T) f32
    out_ref[0] = out.astype(out_ref.dtype)


def _pallas_warp(img_2d, flow_f, grid_xy, *, N, C, H, W, HW, T, vmem_limit,
                 flow_sign, out_dtype, img_buffers):
    kernel = functools.partial(_warp_kernel, C=C, H=H, W=W, flow_sign=flow_sign)
    img_spec_kw = {}
    if img_buffers is not None:
        # Image block index never changes along the tile axis -> one VMEM copy.
        img_spec_kw["pipeline_mode"] = pl.Buffered(img_buffers)
    return pl.pallas_call(
        kernel,
        out_shape=jax.ShapeDtypeStruct((N, C, HW), out_dtype),
        grid_spec=pltpu.PrefetchScalarGridSpec(
            num_scalar_prefetch=0,
            grid=(N, HW // T),
            in_specs=[
                pl.BlockSpec((1, C * H, W), lambda b, t: (b, 0, 0),
                             **img_spec_kw),                    # resident image
                pl.BlockSpec((1, 2, T), lambda b, t: (b, 0, t)),  # flow tile
                pl.BlockSpec((2, T), lambda b, t: (0, t)),        # grid coords
            ],
            out_specs=pl.BlockSpec((1, C, T), lambda b, t: (b, 0, t)),
        ),
        compiler_params=pltpu.CompilerParams(
            dimension_semantics=("parallel", "parallel"),
            vmem_limit_bytes=vmem_limit,
        ),
    )(img_2d, flow_f, grid_xy)


def _warp(img, flow, flow_sign, *, use_bf16_matmul=True):
    N, C, H, W = img.shape
    assert flow.shape == (N, 2, H, W), flow.shape
    HW = H * W

    # bf16 MXU operands are the fast path on v5e/v6e/v7x (f32 matmuls are
    # multi-pass); all bilinear-weight math + accumulation stay in f32.
    mxu_dtype = jnp.bfloat16 if use_bf16_matmul else jnp.float32
    out_dtype = img.dtype

    img_2d = img.astype(mxu_dtype).reshape(N, C * H, W)   # MXU LHS layout
    flow_f = flow.astype(jnp.float32).reshape(N, 2, HW)   # lane-dense flow

    # Precomputed grid coordinates (the torch module's gridX/gridY buffers).
    gy_np, gx_np = np.mgrid[0:H, 0:W]
    grid_xy = jnp.asarray(
        np.stack([gx_np.reshape(HW), gy_np.reshape(HW)], axis=0),
        dtype=jnp.float32)                                 # (2, HW)

    itemsize = jnp.dtype(mxu_dtype).itemsize
    T, vmem_limit = _plan_tiles(C, H, W, itemsize)

    call = functools.partial(
        _pallas_warp, img_2d, flow_f, grid_xy, N=N, C=C, H=H, W=W, HW=HW, T=T,
        vmem_limit=vmem_limit, flow_sign=flow_sign, out_dtype=out_dtype)

    # Only ask for the single-buffered resident image when its footprint is
    # worth reclaiming (v7x 64 MiB/TC); small blocks stay on the default path.
    if C * H * W * itemsize >= (4 << 20):
        try:
            out_flat = call(img_buffers=1)
        except Exception:
            # Older jax without BlockSpec(pipeline_mode=...); the VMEM plan
            # already budgets the double-buffered image.
            out_flat = call(img_buffers=None)
    else:
        out_flat = call(img_buffers=None)
    return out_flat.reshape(N, C, H, W)


def forwardwarp(img, flow, *, use_bf16_matmul=True):
    """I1 = forwardwarp(I0, F_0_1): grid_sample(img, g - flow)."""
    return _warp(img, flow, flow_sign=-1.0, use_bf16_matmul=use_bf16_matmul)


def backwarp(img, flow, *, use_bf16_matmul=True):
    """I0 = backwarp(I1, F_0_1): grid_sample(img, g + flow)."""
    return _warp(img, flow, flow_sign=1.0, use_bf16_matmul=use_bf16_matmul)


def _warp_ref_np(img, flow, flow_sign):
    """Numpy reference of grid_sample(bilinear, zeros, align_corners=False)."""
    img = np.asarray(img, np.float32)
    flow = np.asarray(flow, np.float32)
    N, C, H, W = img.shape
    out = np.zeros_like(img)
    for n in range(N):
        for i in range(H):
            for j in range(W):
                ix = j + flow_sign * flow[n, 0, i, j] - 0.5
                iy = i + flow_sign * flow[n, 1, i, j] - 0.5
                x0 = int(np.floor(ix))
                y0 = int(np.floor(iy))
                fx = ix - x0
                fy = iy - y0
                for dy in (0, 1):
                    for dx in (0, 1):
                        xc, yc = x0 + dx, y0 + dy
                        wx = fx if dx else 1.0 - fx
                        wy = fy if dy else 1.0 - fy
                        if 0 <= xc < W and 0 <= yc < H:
                            out[n, :, i, j] += wx * wy * img[n, :, yc, xc]
    return out


if __name__ == "__main__":
    key = jax.random.PRNGKey(0)
    k_img, k_flow = jax.random.split(key)

    N, C, H, W = 2, 4, 16, 16
    img = jax.random.normal(k_img, (N, C, H, W), dtype=jnp.float32)
    # flows of a few pixels, including samples that land out of bounds
    flow = 3.0 * jax.random.normal(k_flow, (N, 2, H, W), dtype=jnp.float32)

    ref_fw = _warp_ref_np(img, flow, -1.0)
    ref_bw = _warp_ref_np(img, flow, 1.0)

    # Exact (f32-MXU) path: tight tolerance.
    out_fw32 = jax.block_until_ready(forwardwarp(img, flow, use_bf16_matmul=False))
    np.testing.assert_allclose(np.asarray(out_fw32), ref_fw, rtol=1e-4, atol=1e-4)
    out_bw32 = jax.block_until_ready(backwarp(img, flow, use_bf16_matmul=False))
    np.testing.assert_allclose(np.asarray(out_bw32), ref_bw, rtol=1e-4, atol=1e-4)

    # Default fast path (bf16 MXU operands, f32 weights/accumulation):
    # corner selection is identical (f32 coords), only values are bf16-rounded.
    out_fw = jax.block_until_ready(forwardwarp(img, flow))
    np.testing.assert_allclose(np.asarray(out_fw), ref_fw, rtol=5e-2, atol=5e-2)
    out_bw = jax.block_until_ready(backwarp(img, flow))
    np.testing.assert_allclose(np.asarray(out_bw), ref_bw, rtol=5e-2, atol=5e-2)

    print("KERNEL_OK")
</pallas_src>

<mosaic_0001>
module attributes {stable_mosaic.version = 11 : i64} {
  func.func @_warp_kernel(%arg0: i32, %arg1: i32, %arg2: memref<1x64x16xf32, #tpu.memory_space<vmem>>, %arg3: memref<1x2x256xf32, #tpu.memory_space<vmem>>, %arg4: memref<2x256xf32, #tpu.memory_space<vmem>>, %arg5: memref<1x4x256xf32, #tpu.memory_space<vmem>>) attributes {dimension_semantics = [#tpu.dimension_semantics<parallel>, #tpu.dimension_semantics<parallel>], iteration_bounds = array<i64: 2, 1>, scalar_prefetch = 0 : i64, scratch_operands = 0 : i64, tpu.core_type = #tpu.core_type<tc>, window_params = [{transform_indices = @transform_0, window_bounds = array<i64: 1, 64, 16>}, {transform_indices = @transform_1, window_bounds = array<i64: 1, 2, 256>}, {transform_indices = @transform_2, window_bounds = array<i64: 2, 256>}, {transform_indices = @transform_3, window_bounds = array<i64: 1, 4, 256>}]} {
    %c0 = arith.constant 0 : index
    %c0_0 = arith.constant 0 : index
    %c0_1 = arith.constant 0 : index
    %0 = vector.load %arg3[%c0, %c0_0, %c0_1] : memref<1x2x256xf32, #tpu.memory_space<vmem>>, vector<1x1x256xf32>
    %1 = vector.shape_cast %0 : vector<1x1x256xf32> to vector<1x256xf32>
    %c0_2 = arith.constant 0 : index
    %c1 = arith.constant 1 : index
    %c0_3 = arith.constant 0 : index
    %2 = vector.load %arg3[%c0_2, %c1, %c0_3] : memref<1x2x256xf32, #tpu.memory_space<vmem>>, vector<1x1x256xf32>
    %3 = vector.shape_cast %2 : vector<1x1x256xf32> to vector<1x256xf32>
    %c0_4 = arith.constant 0 : index
    %c0_5 = arith.constant 0 : index
    %4 = vector.load %arg4[%c0_4, %c0_5] : memref<2x256xf32, #tpu.memory_space<vmem>>, vector<1x256xf32>
    %c1_6 = arith.constant 1 : index
    %c0_7 = arith.constant 0 : index
    %5 = vector.load %arg4[%c1_6, %c0_7] : memref<2x256xf32, #tpu.memory_space<vmem>>, vector<1x256xf32>
    %cst = arith.constant -1.000000e+00 : f32
    %6 = vector.broadcast %cst : f32 to vector<1x256xf32>
    %7 = arith.mulf %6, %1 : vector<1x256xf32>
    %8 = arith.addf %4, %7 : vector<1x256xf32>
    %cst_8 = arith.constant 5.000000e-01 : f32
    %9 = vector.broadcast %cst_8 : f32 to vector<1x256xf32>
    %10 = arith.subf %8, %9 : vector<1x256xf32>
    %cst_9 = arith.constant -1.000000e+00 : f32
    %11 = vector.broadcast %cst_9 : f32 to vector<1x256xf32>
    %12 = arith.mulf %11, %3 : vector<1x256xf32>
    %13 = arith.addf %5, %12 : vector<1x256xf32>
    %cst_10 = arith.constant 5.000000e-01 : f32
    %14 = vector.broadcast %cst_10 : f32 to vector<1x256xf32>
    %15 = arith.subf %13, %14 : vector<1x256xf32>
    %cst_11 = arith.constant -2.000000e+00 : f32
    %cst_12 = arith.constant 1.700000e+01 : f32
    %16 = vector.broadcast %cst_11 : f32 to vector<1x256xf32>
    %17 = arith.maximumf %16, %10 : vector<1x256xf32>
    %18 = vector.broadcast %cst_12 : f32 to vector<1x256xf32>
    %19 = arith.minimumf %18, %17 : vector<1x256xf32>
    %cst_13 = arith.constant -2.000000e+00 : f32
    %cst_14 = arith.constant 1.700000e+01 : f32
    %20 = vector.broadcast %cst_13 : f32 to vector<1x256xf32>
    %21 = arith.maximumf %20, %15 : vector<1x256xf32>
    %22 = vector.broadcast %cst_14 : f32 to vector<1x256xf32>
    %23 = arith.minimumf %22, %21 : vector<1x256xf32>
    %24 = math.floor %19 : vector<1x256xf32>
    %25 = math.floor %23 : vector<1x256xf32>
    %26 = arith.subf %19, %24 : vector<1x256xf32>
    %27 = arith.subf %23, %25 : vector<1x256xf32>
    %28 = arith.fptosi %24 : vector<1x256xf32> to vector<1x256xi32>
    %29 = arith.fptosi %25 : vector<1x256xf32> to vector<1x256xi32>
    %30 = tpu.iota {dimensions = array<i32: 0>} : vector<16x256xi32>
    %31 = tpu.iota {dimensions = array<i32: 0>} : vector<16x256xi32>
    %32 = vector.broadcast %28 : vector<1x256xi32> to vector<16x256xi32>
    %33 = arith.cmpi eq, %30, %32 : vector<16x256xi32>
    %cst_15 = arith.constant 1.000000e+00 : f32
    %34 = vector.broadcast %cst_15 : f32 to vector<1x256xf32>
    %35 = arith.subf %34, %26 : vector<1x256xf32>
    %cst_16 = arith.constant 0.000000e+00 : f32
    %36 = vector.shape_cast %35 : vector<1x256xf32> to vector<1x256xf32>
    %37 = vector.broadcast %36 : vector<1x256xf32> to vector<16x256xf32>
    %38 = vector.broadcast %cst_16 : f32 to vector<16x256xf32>
    %39 = arith.select %33, %37, %38 : vector<16x256xi1>, vector<16x256xf32>
    %c1_i32 = arith.constant 1 : i32
    %40 = vector.broadcast %c1_i32 : i32 to vector<1x256xi32>
    %41 = arith.addi %28, %40 : vector<1x256xi32>
    %42 = vector.broadcast %41 : vector<1x256xi32> to vector<16x256xi32>
    %43 = arith.cmpi eq, %30, %42 : vector<16x256xi32>
    %cst_17 = arith.constant 0.000000e+00 : f32
    %44 = vector.shape_cast %26 : vector<1x256xf32> to vector<1x256xf32>
    %45 = vector.broadcast %44 : vector<1x256xf32> to vector<16x256xf32>
    %46 = vector.broadcast %cst_17 : f32 to vector<16x256xf32>
    %47 = arith.select %43, %45, %46 : vector<16x256xi1>, vector<16x256xf32>
    %48 = arith.addf %39, %47 : vector<16x256xf32>
    %49 = vector.broadcast %29 : vector<1x256xi32> to vector<16x256xi32>
    %50 = arith.cmpi eq, %31, %49 : vector<16x256xi32>
    %cst_18 = arith.constant 1.000000e+00 : f32
    %51 = vector.broadcast %cst_18 : f32 to vector<1x256xf32>
    %52 = arith.subf %51, %27 : vector<1x256xf32>
    %cst_19 = arith.constant 0.000000e+00 : f32
    %53 = vector.shape_cast %52 : vector<1x256xf32> to vector<1x256xf32>
    %54 = vector.broadcast %53 : vector<1x256xf32> to vector<16x256xf32>
    %55 = vector.broadcast %cst_19 : f32 to vector<16x256xf32>
    %56 = arith.select %50, %54, %55 : vector<16x256xi1>, vector<16x256xf32>
    %c1_i32_20 = arith.constant 1 : i32
    %57 = vector.broadcast %c1_i32_20 : i32 to vector<1x256xi32>
    %58 = arith.addi %29, %57 : vector<1x256xi32>
    %59 = vector.broadcast %58 : vector<1x256xi32> to vector<16x256xi32>
    %60 = arith.cmpi eq, %31, %59 : vector<16x256xi32>
    %cst_21 = arith.constant 0.000000e+00 : f32
    %61 = vector.shape_cast %27 : vector<1x256xf32> to vector<1x256xf32>
    %62 = vector.broadcast %61 : vector<1x256xf32> to vector<16x256xf32>
    %63 = vector.broadcast %cst_21 : f32 to vector<16x256xf32>
    %64 = arith.select %60, %62, %63 : vector<16x256xi1>, vector<16x256xf32>
    %65 = arith.addf %56, %64 : vector<16x256xf32>
    %c0_22 = arith.constant 0 : index
    %c0_23 = arith.constant 0 : index
    %c0_24 = arith.constant 0 : index
    %66 = vector.load %arg2[%c0_22, %c0_23, %c0_24] : memref<1x64x16xf32, #tpu.memory_space<vmem>>, vector<1x64x16xf32>
    %67 = vector.shape_cast %66 : vector<1x64x16xf32> to vector<64x16xf32>
    %cst_25 = arith.constant dense<0.000000e+00> : vector<64x256xf32>
    %68 = tpu.matmul %67, %48, %cst_25 {dimension_numbers = #tpu.dot_dimension_numbers<[1], [0], [0], [1], [0, 0, 1, 1], [], []>} : vector<64x16xf32>, vector<16x256xf32>, vector<64x256xf32> -> vector<64x256xf32>
    %69 = vector.shape_cast %68 : vector<64x256xf32> to vector<4x16x256xf32>
    %70 = vector.shape_cast %65 : vector<16x256xf32> to vector<1x16x256xf32>
    %71 = vector.broadcast %70 : vector<1x16x256xf32> to vector<4x16x256xf32>
    %72 = arith.mulf %69, %71 : vector<4x16x256xf32>
    %cst_26 = arith.constant dense<0.000000e+00> : vector<4x256xf32>
    %73 = vector.multi_reduction <add>, %72, %cst_26 [1] : vector<4x16x256xf32> to vector<4x256xf32>
    %c0_27 = arith.constant 0 : index
    %c0_28 = arith.constant 0 : index
    %c0_29 = arith.constant 0 : index
    %74 = vector.load %arg5[%c0_27, %c0_28, %c0_29] : memref<1x4x256xf32, #tpu.memory_space<vmem>>, vector<1x4x256xf32>
    %75 = vector.shape_cast %74 : vector<1x4x256xf32> to vector<4x256xf32>
    %76 = vector.shape_cast %73 : vector<4x256xf32> to vector<1x4x256xf32>
    tpu.vector_store %arg5[%c0_27, %c0_28, %c0_29], %76 {strides = array<i32>} : memref<1x4x256xf32, #tpu.memory_space<vmem>>, vector<1x4x256xf32>,
    return
  }
  func.func @transform_0(%arg0: i32, %arg1: i32) -> (i32, i32, i32) {
    %c0_i32 = arith.constant 0 : i32
    %c0_i32_0 = arith.constant 0 : i32
    %c0_i32_1 = arith.constant 0 : i32
    return %arg0, %c0_i32, %c0_i32_0 : i32, i32, i32
  }
  func.func @transform_1(%arg0: i32, %arg1: i32) -> (i32, i32, i32) {
    %c0_i32 = arith.constant 0 : i32
    %c0_i32_0 = arith.constant 0 : i32
    return %arg0, %c0_i32, %arg1 : i32, i32, i32
  }
  func.func @transform_2(%arg0: i32, %arg1: i32) -> (i32, i32) {
    %c0_i32 = arith.constant 0 : i32
    %c0_i32_0 = arith.constant 0 : i32
    return %c0_i32, %arg1 : i32, i32
  }
  func.func @transform_3(%arg0: i32, %arg1: i32) -> (i32, i32, i32) {
    %c0_i32 = arith.constant 0 : i32
    %c0_i32_0 = arith.constant 0 : i32
    return %arg0, %c0_i32, %arg1 : i32, i32, i32
  }
}

</mosaic_0001>

<llo_original>
// kernel: tpu_custom_call.1
$region0: #{tpu_custom_call.1}
  #allocation0 [shape = 'u32[]', space=smem, size = 0x4, offset = 0x4, fixed_abs, tag = 'smem constant byte address 0x4 - core index']
  #allocation1 [shape = 'u32[144,128]{1,0:T(1,128)}', space=vmem, size = 0x12000, scoped, tag = 'internal scratch']
  %s0 = inlined_call_operand.vmem [shape: f32[2,64,16], index: 0, kind: input, shape index: {}]
  %s1 = inlined_call_operand.vmem [shape: f32[2,2,256], index: 1, kind: input, shape index: {}]
  %s2 = inlined_call_operand.vmem [shape: f32[2,256], index: 2, kind: input, shape index: {}]
  %s3 = inlined_call_operand.hbm [shape: f32[2,4,256], index: 3, kind: output, shape index: {}]
  %s4 = sld [smem:[#allocation0]]
  $region45: #{tpu_custom_call.1} parent=0
    _
  %s6 = ssub.s32 1, %s4
  %s7 = scalar_select 0, %s6, %s4
  $region1: #{tpu_custom_call.1} parent=0
    #allocation2 [shape = 'u8[8192]{0}', space=vmem, size = 0x2000, scoped, tag = 'output window, operand 0']
    #allocation3 [shape = 's32[2]{0}', space=sflag, size = 0x8, scoped, tag = 'scoped memory for tpu_custom_call.1']
    %8 = vsyncpa [#allocation3], 0
    %s9 = scalar_lea.sflag [#allocation3], 1
    %10 = vsyncpa %s9, 0
    loop: start=0, step=1, limit=4
    $region2: #{tpu_custom_call.1} parent=1 // loop_pre_header
      _
    $region3: #{tpu_custom_call.1} parent=1 // loop_header
      %s12 = sphi 0, %s16
      %p13 = scmp.ge.s32.totalorder %s12, 4
      %s19 = sphi 0, %s31
      %s20 = sphi 0, %s27
      %s21 = sphi 0, %s19
      %s22 = sphi 0, %s20
      %s23 = sphi 0, %s21
      %s24 = sphi 0, %s22
      %s34 = sphi 0, %s36
      %s37 = sphi 0, %s34
      %s38 = sphi 0, %s37
      %s54 = sphi 0, %s38
      %s62 = sphi 0, %s64
      %s65 = sphi 0, %s62
      %s66 = sphi 0, %s65
      %s82 = sphi 0, %s66
      %s88 = sphi 0, %s90
      %s91 = sphi 0, %s88
      %s92 = sphi 0, %s91
      %s108 = sphi 0, %s92
      %s116 = sphi 0, %s118
      %s119 = sphi 0, %s116
      %s120 = sphi 0, %s119
      %s136 = sphi 0, %s120
    $region4: #{tpu_custom_call.1} parent=1 // loop_header_branch
      %15 = sbr.rel (%p13) target = $region8
    $region5: #{tpu_custom_call.1} parent=1 // loop_body
      %s17 = ssub.s32 %s12, 1
      %s18 = ssub.s32 %s12, 2
      %s25 = sadd.s32 1, %s20
      %p26 = scmp.ge.s32.totalorder %s25, 1
      %s27 = scalar_select %p26, 0, %s25
      %s28 = sadd.s32 1, %s19
      %s29 = scalar_select %p26, %s28, %s19
      %p30 = scmp.ge.s32.totalorder %s29, 2
      %s31 = scalar_select %p30, 0, %s29
      %s32 = ssub.s32 %s19, %s31
      %p33 = scmp.eq.s32.totalorder %s32, 0
      %s35 = sadd.s32 %s34, 1
      %s36 = scalar_select %p33, %s34, %s35
      %p39 = pneg %p33
      %p40 = scmp.eq.s32.totalorder %s12, 1
      %p41 = por %p39, %p40
      %p42 = scmp.ne.s32.totalorder %s34, %s37
      %p43 = scmp.eq.s32.totalorder %s12, 0
      %p44 = por %p42, %p43
      %p45 = scmp.ne.s32.totalorder %s34, %s37
      %p46 = scmp.eq.s32.totalorder %s17, 1
      %p47 = por %p45, %p46
      %p48 = scmp.ne.s32.totalorder %s37, %s38
      %p49 = scmp.eq.s32.totalorder %s17, 0
      %p50 = por %p48, %p49
      %p51 = scmp.ne.s32.totalorder %s37, %s38
      %p52 = scmp.eq.s32.totalorder %s18, 1
      %p53 = por %p51, %p52
      %p55 = scmp.ne.s32.totalorder %s38, %s54
      %p56 = scmp.eq.s32.totalorder %s18, 0
      %p57 = por %p55, %p56
      %s58 = ssub.s32 %s19, %s31
      %s59 = ssub.s32 %s20, %s27
      %s60 = sor.u32 %s58, %s59
      %p61 = scmp.eq.s32.totalorder %s60, 0
      %s63 = sadd.s32 %s62, 1
      %s64 = scalar_select %p61, %s62, %s63
      %p67 = pneg %p61
      %p68 = scmp.eq.s32.totalorder %s12, 1
      %p69 = por %p67, %p68
      %p70 = scmp.ne.s32.totalorder %s62, %s65
      %p71 = scmp.eq.s32.totalorder %s12, 0
      %p72 = por %p70, %p71
      %p73 = scmp.ne.s32.totalorder %s62, %s65
      %p74 = scmp.eq.s32.totalorder %s17, 1
      %p75 = por %p73, %p74
      %p76 = scmp.ne.s32.totalorder %s65, %s66
      %p77 = scmp.eq.s32.totalorder %s17, 0
      %p78 = por %p76, %p77
      %p79 = scmp.ne.s32.totalorder %s65, %s66
      %p80 = scmp.eq.s32.totalorder %s18, 1
      %p81 = por %p79, %p80
      %p83 = scmp.ne.s32.totalorder %s66, %s82
      %p84 = scmp.eq.s32.totalorder %s18, 0
      %p85 = por %p83, %p84
      %s86 = ssub.s32 %s20, %s27
      %p87 = scmp.eq.s32.totalorder %s86, 0
      %s89 = sadd.s32 %s88, 1
      %s90 = scalar_select %p87, %s88, %s89
      %p93 = pneg %p87
      %p94 = scmp.eq.s32.totalorder %s12, 1
      %p95 = por %p93, %p94
      %p96 = scmp.ne.s32.totalorder %s88, %s91
      %p97 = scmp.eq.s32.totalorder %s12, 0
      %p98 = por %p96, %p97
      %p99 = scmp.ne.s32.totalorder %s88, %s91
      %p100 = scmp.eq.s32.totalorder %s17, 1
      %p101 = por %p99, %p100
      %p102 = scmp.ne.s32.totalorder %s91, %s92
      %p103 = scmp.eq.s32.totalorder %s17, 0
      %p104 = por %p102, %p103
      %p105 = scmp.ne.s32.totalorder %s91, %s92
      %p106 = scmp.eq.s32.totalorder %s18, 1
      %p107 = por %p105, %p106
      %p109 = scmp.ne.s32.totalorder %s92, %s108
      %p110 = scmp.eq.s32.totalorder %s18, 0
      %p111 = por %p109, %p110
      %s112 = ssub.s32 %s19, %s31
      %s113 = ssub.s32 %s20, %s27
      %s114 = sor.u32 %s112, %s113
      %p115 = scmp.eq.s32.totalorder %s114, 0
      %s117 = sadd.s32 %s116, 1
      %s118 = scalar_select %p115, %s116, %s117
      %p121 = pneg %p115
      %p122 = scmp.eq.s32.totalorder %s12, 1
      %p123 = por %p121, %p122
      %p124 = scmp.ne.s32.totalorder %s116, %s119
      %p125 = scmp.eq.s32.totalorder %s12, 0
      %p126 = por %p124, %p125
      %p127 = scmp.ne.s32.totalorder %s116, %s119
      %p128 = scmp.eq.s32.totalorder %s17, 1
      %p129 = por %p127, %p128
      %p130 = scmp.ne.s32.totalorder %s119, %s120
      %p131 = scmp.eq.s32.totalorder %s17, 0
      %p132 = por %p130, %p131
      %p133 = scmp.ne.s32.totalorder %s119, %s120
      %p134 = scmp.eq.s32.totalorder %s18, 1
      %p135 = por %p133, %p134
      %p137 = scmp.ne.s32.totalorder %s120, %s136
      %p138 = scmp.eq.s32.totalorder %s18, 0
      %p139 = por %p137, %p138
      %p140 = scmp.le.s32.totalorder 1, %s12
      %p141 = scmp.lt.s32.totalorder %s12, 3
      %p142 = pnand %p140, %p141
      %p143 = pneg %p142
      // Predicated region
      $region9: #{tpu_custom_call.1} parent=5 // pred_check
        _
      $region10: #{tpu_custom_call.1} parent=5 // pred_check_branch
        %145 = sbr.rel (%p142) target = $region12
      $region11: #{tpu_custom_call.1} parent=5 // pred_region
        %s146 = ssub.s32 %s12, 1
        // Predicated region
        $region13: #{tpu_custom_call.1} parent=11 // pred_check
          %p147 = pneg %p104
        $region14: #{tpu_custom_call.1} parent=11 // pred_check_branch
          %149 = sbr.rel (%p147) target = $region16
        $region15: #{tpu_custom_call.1} parent=11 // pred_region
          %s150 = smul.u32 2, %s22
          %p151 = scmp.lt.s32.totalorder %s150, 1
          %s152 = scalar_select %p151, %s150, 1
          %s153 = smul.addr %s152, 2
          %s154 = scalar_lea.vmem %s2, %s153
          %s155 = smul.u32 2, %s22
        $region16: #{tpu_custom_call.1} parent=11 // pred_fallthru
          _
      $region12: #{tpu_custom_call.1} parent=5 // pred_fallthru
        _
      %p156 = scmp.lt.s32.totalorder %s12, 2
      // Predicated region
      $region17: #{tpu_custom_call.1} parent=5 // pred_check
        %p157 = pneg %p156
      $region18: #{tpu_custom_call.1} parent=5 // pred_check_branch
        %159 = sbr.rel (%p157) target = $region20
      $region19: #{tpu_custom_call.1} parent=5 // pred_region
        // Predicated region
        $region21: #{tpu_custom_call.1} parent=19 // pred_check
          %p160 = pneg %p44
        $region22: #{tpu_custom_call.1} parent=19 // pred_check_branch
          %162 = sbr.rel (%p160) target = $region24
        $region23: #{tpu_custom_call.1} parent=19 // pred_region
          %p163 = scmp.lt.s32.totalorder %s19, 1
          %s164 = scalar_select %p163, %s19, 1
          %s165 = smul.addr %s164, 8
          %s166 = smul.addr %s165, 8
          %s167 = scalar_lea.vmem %s0, %s166
        $region24: #{tpu_custom_call.1} parent=19 // pred_fallthru
          _
        // Predicated region
        $region25: #{tpu_custom_call.1} parent=19 // pred_check
          %p168 = pneg %p72
        $region26: #{tpu_custom_call.1} parent=19 // pred_check_branch
          %170 = sbr.rel (%p168) target = $region28
        $region27: #{tpu_custom_call.1} parent=19 // pred_region
          %s171 = smul.u32 2, %s20
          %p172 = scmp.lt.s32.totalorder %s19, 1
          %s173 = scalar_select %p172, %s19, 1
          %p174 = scmp.lt.s32.totalorder %s171, 1
          %s175 = scalar_select %p174, %s171, 1
          %s176 = smul.addr %s173, 2
          %s177 = sadd.s32 %s175, %s176
          %s178 = smul.addr %s177, 2
          %s179 = scalar_lea.vmem %s1, %s178
          %s180 = smul.u32 2, %s20
        $region28: #{tpu_custom_call.1} parent=19 // pred_fallthru
          _
      $region20: #{tpu_custom_call.1} parent=5 // pred_fallthru
        _
      %p181 = scmp.le.s32.totalorder 1, %s12
      %p182 = scmp.lt.s32.totalorder %s12, 3
      %p183 = pnand %p181, %p182
      %p184 = pneg %p183
      // Predicated region
      $region29: #{tpu_custom_call.1} parent=5 // pred_check
        _
      $region30: #{tpu_custom_call.1} parent=5 // pred_check_branch
        %186 = sbr.rel (%p183) target = $region32
      $region31: #{tpu_custom_call.1} parent=5 // pred_region
        %s187 = ssub.s32 %s12, 1
        %p188 = scmp.lt.s32.totalorder %s21, 1
        %s189 = scalar_select %p188, %s21, 1
        %s190 = smul.addr %s189, 8
        %s191 = smul.addr %s190, 8
        %s192 = scalar_lea.vmem %s0, %s191
        %p193 = pneg %p50
        %p194 = pneg %p47
        %s195 = smul.u32 2, %s22
        %p196 = scmp.lt.s32.totalorder %s21, 1
        %s197 = scalar_select %p196, %s21, 1
        %p198 = scmp.lt.s32.totalorder %s195, 1
        %s199 = scalar_select %p198, %s195, 1
        %s200 = smul.addr %s197, 2
        %s201 = sadd.s32 %s199, %s200
        %s202 = smul.addr %s201, 2
        %s203 = scalar_lea.vmem %s1, %s202
        %p204 = pneg %p78
        %p205 = pneg %p75
        %s206 = smul.u32 2, %s22
        %p207 = scmp.lt.s32.totalorder %s206, 1
        %s208 = scalar_select %p207, %s206, 1
        %s209 = smul.addr %s208, 2
        %s210 = scalar_lea.vmem %s2, %s209
        %p211 = pneg %p104
        %p212 = pneg %p101
        %p213 = pneg %p132
        %p214 = pneg %p129
        %s215 = sand.u32 %s119, 1
        %s216 = scalar_lea.sflag [#allocation3], %s215
        %s217 = sand.u32 %s119, 1
        %s218 = smul.addr %s217, 8
        %s219 = scalar_lea.vmem [#allocation2], %s218
        %p220 = scmp.lt.s32.totalorder %s21, 1
        %s221 = scalar_select %p220, %s21, 1
        %s222 = smul.addr %s221, 8
        %s223 = smul.addr %s222, 8
        %s224 = scalar_lea.vmem %s0, %s223
        %s225 = smul.u32 2, %s22
        %p226 = scmp.lt.s32.totalorder %s21, 1
        %s227 = scalar_select %p226, %s21, 1
        %p228 = scmp.lt.s32.totalorder %s225, 1
        %s229 = scalar_select %p228, %s225, 1
        %s230 = smul.addr %s227, 2
        %s231 = sadd.s32 %s229, %s230
        %s232 = smul.addr %s231, 2
        %s233 = scalar_lea.vmem %s1, %s232
        %s234 = smul.u32 2, %s22
        %s235 = smul.u32 2, %s22
        %p236 = scmp.lt.s32.totalorder %s235, 1
        %s237 = scalar_select %p236, %s235, 1
        %s238 = smul.addr %s237, 2
        %s239 = scalar_lea.vmem %s2, %s238
        %s240 = smul.u32 2, %s22
        %s241 = smul.u32 2, %s22
        %v242 = vld [vmem:[%s233] ss:$2 sm:$0x3]
        %s243 = scalar_lea.vmem %s233, 1
        %v244 = vld [vmem:[%s243] ss:$2 sm:$0x3]
        %v245 = vld [vmem:[%s239] ss:$2 sm:$0x3]
        %s246 = scalar_lea.vmem %s239, 1
        %v247 = vld [vmem:[%s246] ss:$2 sm:$0x3]
        %v248 = vmul.f32 %v242, -1.0
        %v249 = vadd.f32 %v245, %v248
        %v250 = vsub.f32 %v249, 0.5
        %v251 = vmul.f32 %v244, -1.0
        %v252 = vadd.f32 %v247, %v251
        %v253 = vsub.f32 %v252, 0.5
        %v254 = vmax.f32 %v250, -2.0
        %v255 = vmin.f32 %v254, 17.0
        %v256 = vmax.f32 %v253, -2.0
        %v257 = vmin.f32 %v256, 17.0
        %v258 = vfloor.f32 %v255
        %v259 = vfloor.f32 %v257
        %v260 = vsub.f32 %v255, %v258
        %v261 = vsub.f32 %v257, %v259
        %v262 = vcvt.f32.s32.to.zero.pseudo %v258
        %v263 = vcvt.f32.s32.to.zero.pseudo %v259
        %v264 = vlaneseq
        %v265 = vshrl.u32 %v264, 7
        %v266 = vadd.s32 %v265, 8
        %v267 = vlaneseq
        %v268 = vshrl.u32 %v267, 7
        %v269 = vsub.s32 0, %v268
        %v270 = vrot.slane %v262, %v269
        %v271 = vlaneseq
        %v272 = vshrl.u32 %v271, 7
        %v273 = vsub.s32 1, %v272
        %v274 = vrot.slane %v262, %v273
        %vm275 = vcmp.eq.s32.totalorder %v265, %v270
        %vm276 = vcmp.eq.s32.totalorder %v265, %v274
        %vm277 = vcmp.eq.s32.totalorder %v266, %v270
        %vm278 = vcmp.eq.s32.totalorder %v266, %v274
        %v279 = vsub.f32 1.0, %v260
        %v281 = vlaneseq
        %v282 = vshrl.u32 %v281, 7
        %v283 = vsub.s32 0, %v282
        %v284 = vrot.slane %v279, %v283
        %v285 = vlaneseq
        %v286 = vshrl.u32 %v285, 7
        %v287 = vsub.s32 1, %v286
        %v288 = vrot.slane %v279, %v287
        %v291 = vsel %vm275, %v284, 0.0
        %v292 = vsel %vm276, %v288, 0.0
        %v293 = vsel %vm277, %v284, 0.0
        %v294 = vsel %vm278, %v288, 0.0
        %v295 = vadd.s32 %v262, 1
        %v296 = vlaneseq
        %v297 = vshrl.u32 %v296, 7
        %v298 = vsub.s32 0, %v297
        %v299 = vrot.slane %v295, %v298
        %v300 = vlaneseq
        %v301 = vshrl.u32 %v300, 7
        %v302 = vsub.s32 1, %v301
        %v303 = vrot.slane %v295, %v302
        %vm304 = vcmp.eq.s32.totalorder %v265, %v299
        %vm305 = vcmp.eq.s32.totalorder %v265, %v303
        %vm306 = vcmp.eq.s32.totalorder %v266, %v299
        %vm307 = vcmp.eq.s32.totalorder %v266, %v303
        %v309 = vlaneseq
        %v310 = vshrl.u32 %v309, 7
        %v311 = vsub.s32 0, %v310
        %v312 = vrot.slane %v260, %v311
        %v313 = vlaneseq
        %v314 = vshrl.u32 %v313, 7
        %v315 = vsub.s32 1, %v314
        %v316 = vrot.slane %v260, %v315
        %v319 = vsel %vm304, %v312, 0.0
        %v320 = vsel %vm305, %v316, 0.0
        %v321 = vsel %vm306, %v312, 0.0
        %v322 = vsel %vm307, %v316, 0.0
        %v323 = vadd.f32 %v291, %v319
        %v324 = vadd.f32 %v292, %v320
        %v325 = vadd.f32 %v293, %v321
        %v326 = vadd.f32 %v294, %v322
        %v327 = vlaneseq
        %v328 = vshrl.u32 %v327, 7
        %v329 = vsub.s32 0, %v328
        %v330 = vrot.slane %v263, %v329
        %v331 = vlaneseq
        %v332 = vshrl.u32 %v331, 7
        %v333 = vsub.s32 1, %v332
        %v334 = vrot.slane %v263, %v333
        %vm335 = vcmp.eq.s32.totalorder %v265, %v330
        %vm336 = vcmp.eq.s32.totalorder %v265, %v334
        %vm337 = vcmp.eq.s32.totalorder %v266, %v330
        %vm338 = vcmp.eq.s32.totalorder %v266, %v334
        %v339 = vsub.f32 1.0, %v261
        %v341 = vlaneseq
        %v342 = vshrl.u32 %v341, 7
        %v343 = vsub.s32 0, %v342
        %v344 = vrot.slane %v339, %v343
        %v345 = vlaneseq
        %v346 = vshrl.u32 %v345, 7
        %v347 = vsub.s32 1, %v346
        %v348 = vrot.slane %v339, %v347
        %v351 = vsel %vm335, %v344, 0.0
        %v352 = vsel %vm336, %v348, 0.0
        %v353 = vsel %vm337, %v344, 0.0
        %v354 = vsel %vm338, %v348, 0.0
        %v355 = vadd.s32 %v263, 1
        %v356 = vlaneseq
        %v357 = vshrl.u32 %v356, 7
        %v358 = vsub.s32 0, %v357
        %v359 = vrot.slane %v355, %v358
        %v360 = vlaneseq
        %v361 = vshrl.u32 %v360, 7
        %v362 = vsub.s32 1, %v361
        %v363 = vrot.slane %v355, %v362
        %vm364 = vcmp.eq.s32.totalorder %v265, %v359
        %vm365 = vcmp.eq.s32.totalorder %v265, %v363
        %vm366 = vcmp.eq.s32.totalorder %v266, %v359
        %vm367 = vcmp.eq.s32.totalorder %v266, %v363
        %v369 = vlaneseq
        %v370 = vshrl.u32 %v369, 7
        %v371 = vsub.s32 0, %v370
        %v372 = vrot.slane %v261, %v371
        %v373 = vlaneseq
        %v374 = vshrl.u32 %v373, 7
        %v375 = vsub.s32 1, %v374
        %v376 = vrot.slane %v261, %v375
        %v379 = vsel %vm364, %v372, 0.0
        %v380 = vsel %vm365, %v376, 0.0
        %v381 = vsel %vm366, %v372, 0.0
        %v382 = vsel %vm367, %v376, 0.0
        %v383 = vadd.f32 %v351, %v379
        %v384 = vadd.f32 %v352, %v380
        %v385 = vadd.f32 %v353, %v381
        %v386 = vadd.f32 %v354, %v382
        %v387 = vld [vmem:[%s224] sm:$0xff]
        %v388 = vld [vmem:[%s224 + $0x8] sm:$0xff]
        %v389 = vld [vmem:[%s224 + $0x10] sm:$0xff]
        %v390 = vld [vmem:[%s224 + $0x18] sm:$0xff]
        %v391 = vld [vmem:[%s224 + $0x20] sm:$0xff]
        %v392 = vld [vmem:[%s224 + $0x28] sm:$0xff]
        %v393 = vld [vmem:[%s224 + $0x30] sm:$0xff]
        %v394 = vld [vmem:[%s224 + $0x38] sm:$0xff]
        %vm395 = vcmask 130048
        %v397 = vsel %vm395, %v387, 0
        %v400 = vsel %vm395, %v388, 0
        %v403 = vsel %vm395, %v389, 0
        %v406 = vsel %vm395, %v390, 0
        %v409 = vsel %vm395, %v391, 0
        %v412 = vsel %vm395, %v392, 0
        %v415 = vsel %vm395, %v393, 0
        %v418 = vsel %vm395, %v394, 0
        %420 = vmatprep.subr.mxu0 0.0
        %421 = vmatpush1.msra.mxu0 0.0
        %422 = vmatprep.subr.mxu0 0.0
        %423 = vmatpush1.msra.mxu0 0.0
        %424 = vmatprep.subr.mxu0 0.0
        %425 = vmatpush1.msra.mxu0 0.0
        %426 = vmatprep.subr.mxu0 0.0
        %427 = vmatpush1.msra.mxu0 0.0
        %428 = vmatprep.subr.mxu0 0.0
        %429 = vmatpush1.msra.mxu0 0.0
        %430 = vmatprep.subr.mxu0 0.0
        %431 = vmatpush1.msra.mxu0 0.0
        %432 = vmatprep.subr.mxu0 0.0
        %433 = vmatpush1.msra.mxu0 0.0
        %434 = vmatprep.subr.mxu0 0.0
        %435 = vmatpush1.msra.mxu0 0.0
        %436 = vmatprep.subr.mxu0 0.0
        %437 = vmatpush1.msra.mxu0 0.0
        %438 = vmatprep.subr.mxu0 0.0
        %439 = vmatpush1.msra.mxu0 0.0
        %440 = vmatprep.subr.mxu0 0.0
        %441 = vmatpush1.msra.mxu0 0.0
        %442 = vmatprep.subr.mxu0 0.0
        %443 = vmatpush1.msra.mxu0 0.0
        %444 = vmatprep.subr.mxu0 0.0
        %445 = vmatpush1.msra.mxu0 0.0
        %446 = vmatprep.subr.mxu0 0.0
        %447 = vmatpush1.msra.mxu0 0.0
        %448 = vmatprep.subr.mxu0 %v326
        %449 = vmatpush1.msra.mxu0 %v325
        %450 = vmatprep.subr.mxu0 %v324
        %451 = vmatpush1.msra.mxu0 %v323
        %452 = vmatprep.subr.mxu0 0.0
        %453 = vmatpush2.msra.mxu0 0.0
        %454 = vmatprep.subr.mxu0 0.0
        %455 = vmatpush2.msra.mxu0 0.0
        %456 = vmatprep.subr.mxu0 0.0
        %457 = vmatpush2.msra.mxu0 0.0
        %458 = vmatprep.subr.mxu0 0.0
        %459 = vmatpush2.msra.mxu0 0.0
        %460 = vmatprep.subr.mxu0 0.0
        %461 = vmatpush2.msra.mxu0 0.0
        %462 = vmatprep.subr.mxu0 0.0
        %463 = vmatpush2.msra.mxu0 0.0
        %464 = vmatprep.subr.mxu0 0.0
        %465 = vmatpush2.msra.mxu0 0.0
        %466 = vmatprep.subr.mxu0 0.0
        %467 = vmatpush2.msra.mxu0 0.0
        %468 = vmatprep.subr.mxu0 0.0
        %469 = vmatpush2.msra.mxu0 0.0
        %470 = vmatprep.subr.mxu0 0.0
        %471 = vmatpush2.msra.mxu0 0.0
        %472 = vmatprep.subr.mxu0 0.0
        %473 = vmatpush2.msra.mxu0 0.0
        %474 = vmatprep.subr.mxu0 0.0
        %475 = vmatpush2.msra.mxu0 0.0
        %476 = vmatprep.subr.mxu0 0.0
        %477 = vmatpush2.msra.mxu0 0.0
        %478 = vmatprep.subr.mxu0 0.0
        %479 = vmatpush2.msra.mxu0 0.0
        %480 = vmatprep.subr.mxu0 0.0
        %481 = vmatpush2.msra.mxu0 0.0
        %482 = vmatprep.subr.mxu0 0.0
        %483 = vmatpush2.msra.mxu0 0.0
        %484 = vmatprep.mubr.f32.mxu0 0.0
        %485 = vmatmul.mubr.f32.gmra.mxu0 %v397
        %v486 = vpop.f32.mrf.mxu0
        %v487 = vadd.f32 0.0, %v486
        %v488 = vpop.f32.mrf.mxu0
        %v489 = vadd.f32 0.0, %v488
        %490 = vmatprep.mubr.f32.mxu0 0.0
        %491 = vmatmul.mubr.f32.gmra.mxu0 %v400
        %v492 = vpop.f32.mrf.mxu0
        %v493 = vadd.f32 0.0, %v492
        %v494 = vpop.f32.mrf.mxu0
        %v495 = vadd.f32 0.0, %v494
        %496 = vmatprep.mubr.f32.mxu0 0.0
        %497 = vmatmul.mubr.f32.gmra.mxu0 %v403
        %v498 = vpop.f32.mrf.mxu0
        %v499 = vadd.f32 0.0, %v498
        %v500 = vpop.f32.mrf.mxu0
        %v501 = vadd.f32 0.0, %v500
        %502 = vmatprep.mubr.f32.mxu0 0.0
        %503 = vmatmul.mubr.f32.gmra.mxu0 %v406
        %v504 = vpop.f32.mrf.mxu0
        %v505 = vadd.f32 0.0, %v504
        %v506 = vpop.f32.mrf.mxu0
        %v507 = vadd.f32 0.0, %v506
        %508 = vmatprep.mubr.f32.mxu0 0.0
        %509 = vmatmul.mubr.f32.gmra.mxu0 %v409
        %v510 = vpop.f32.mrf.mxu0
        %v511 = vadd.f32 0.0, %v510
        %v512 = vpop.f32.mrf.mxu0
        %v513 = vadd.f32 0.0, %v512
        %514 = vmatprep.mubr.f32.mxu0 0.0
        %515 = vmatmul.mubr.f32.gmra.mxu0 %v412
        %v516 = vpop.f32.mrf.mxu0
        %v517 = vadd.f32 0.0, %v516
        %v518 = vpop.f32.mrf.mxu0
        %v519 = vadd.f32 0.0, %v518
        %520 = vmatprep.mubr.f32.mxu0 0.0
        %521 = vmatmul.mubr.f32.gmra.mxu0 %v415
        %v522 = vpop.f32.mrf.mxu0
        %v523 = vadd.f32 0.0, %v522
        %v524 = vpop.f32.mrf.mxu0
        %v525 = vadd.f32 0.0, %v524
        %526 = vmatprep.mubr.f32.mxu0 0.0
        %527 = vmatmul.mubr.f32.gmra.mxu0 %v418
        %v528 = vpop.f32.mrf.mxu0
        %v529 = vadd.f32 0.0, %v528
        %v530 = vpop.f32.mrf.mxu0
        %v531 = vadd.f32 0.0, %v530
        %532 = vdwg.mxu0
        %v533 = vmul.f32 %v487, %v383
        %v534 = vmul.f32 %v489, %v384
        %v535 = vmul.f32 %v493, %v385
        %v536 = vmul.f32 %v495, %v386
        %v537 = vmul.f32 %v499, %v383
        %v538 = vmul.f32 %v501, %v384
        %v539 = vmul.f32 %v505, %v385
        %v540 = vmul.f32 %v507, %v386
        %v541 = vmul.f32 %v511, %v383
        %v542 = vmul.f32 %v513, %v384
        %v543 = vmul.f32 %v517, %v385
        %v544 = vmul.f32 %v519, %v386
        %v545 = vmul.f32 %v523, %v383
        %v546 = vmul.f32 %v525, %v384
        %v547 = vmul.f32 %v529, %v385
        %v548 = vmul.f32 %v531, %v386
        %v549 = vadd.f32 %v533, %v535
        %v550 = vrot.slane %v549, 4
        %v551 = vadd.f32 %v549, %v550
        %v552 = vrot.slane %v551, 2
        %v553 = vadd.f32 %v551, %v552
        %v554 = vrot.slane %v553, 1
        %v555 = vadd.f32 %v553, %v554
        %v556 = vadd.f32 %v534, %v536
        %v557 = vrot.slane %v556, 4
        %v558 = vadd.f32 %v556, %v557
        %v559 = vrot.slane %v558, 2
        %v560 = vadd.f32 %v558, %v559
        %v561 = vrot.slane %v560, 1
        %v562 = vadd.f32 %v560, %v561
        %v563 = vadd.f32 %v537, %v539
        %v564 = vrot.slane %v563, 4
        %v565 = vadd.f32 %v563, %v564
        %v566 = vrot.slane %v565, 2
        %v567 = vadd.f32 %v565, %v566
        %v568 = vrot.slane %v567, 1
        %v569 = vadd.f32 %v567, %v568
        %v570 = vadd.f32 %v538, %v540
        %v571 = vrot.slane %v570, 4
        %v572 = vadd.f32 %v570, %v571
        %v573 = vrot.slane %v572, 2
        %v574 = vadd.f32 %v572, %v573
        %v575 = vrot.slane %v574, 1
        %v576 = vadd.f32 %v574, %v575
        %v577 = vadd.f32 %v541, %v543
        %v578 = vrot.slane %v577, 4
        %v579 = vadd.f32 %v577, %v578
        %v580 = vrot.slane %v579, 2
        %v581 = vadd.f32 %v579, %v580
        %v582 = vrot.slane %v581, 1
        %v583 = vadd.f32 %v581, %v582
        %v584 = vadd.f32 %v542, %v544
        %v585 = vrot.slane %v584, 4
        %v586 = vadd.f32 %v584, %v585
        %v587 = vrot.slane %v586, 2
        %v588 = vadd.f32 %v586, %v587
        %v589 = vrot.slane %v588, 1
        %v590 = vadd.f32 %v588, %v589
        %v591 = vadd.f32 %v545, %v547
        %v592 = vrot.slane %v591, 4
        %v593 = vadd.f32 %v591, %v592
        %v594 = vrot.slane %v593, 2
        %v595 = vadd.f32 %v593, %v594
        %v596 = vrot.slane %v595, 1
        %v597 = vadd.f32 %v595, %v596
        %v598 = vadd.f32 %v546, %v548
        %v599 = vrot.slane %v598, 4
        %v600 = vadd.f32 %v598, %v599
        %v601 = vrot.slane %v600, 2
        %v602 = vadd.f32 %v600, %v601
        %v603 = vrot.slane %v602, 1
        %v604 = vadd.f32 %v602, %v603
        %v613 = vcombine.low %v555, %v562
        %v614 = vcombine.low %v569, %v576
        %v615 = vcombine.low %v583, %v590
        %v616 = vcombine.low %v597, %v604
        %v617 = vrot.slane %v614, 7
        %vm618 = vcmask 1041409
        %v619 = vsel %vm618, %v617, %v613
        %vm620 = vcmask 1045509
        %v621 = vsel %vm620, %v617, %v619
        %v622 = vrot.slane %v615, 6
        %vm623 = vcmask 1042434
        %v624 = vsel %vm623, %v622, %v621
        %vm625 = vcmask 1046534
        %v626 = vsel %vm625, %v622, %v624
        %v627 = vrot.slane %v616, 5
        %vm628 = vcmask 1043459
        %v629 = vsel %vm628, %v627, %v626
        %vm630 = vcmask 1047559
        %v631 = vsel %vm630, %v627, %v629
        %633 = vst [vmem:[%s219] sm:$0xff] %v631
        %s634 = sand.u32 %s119, 1
        %s635 = scalar_lea.sflag [#allocation3], %s634
        %s636 = sand.u32 %s119, 1
        %s637 = smul.addr %s636, 8
        %s638 = scalar_lea.vmem [#allocation2], %s637
        // Predicated region
        $region33: #{tpu_custom_call.1} parent=31 // pred_check
          %p639 = pneg %p129
        $region34: #{tpu_custom_call.1} parent=31 // pred_check_branch
          %641 = sbr.rel (%p639) target = $region36
        $region35: #{tpu_custom_call.1} parent=31 // pred_region
          %s642 = smul.u32 2, %s22
          %s644 = ssub.s32 128, 128
          %645 = vsyncadd %s635, %s644
          %s646 = smul.addr %s21, 2
          %s647 = sadd.s32 %s642, %s646
          %s648 = smul.addr %s647, 64
          %s649 = scalar_lea.hbm %s3, %s648
          %s651 = sshll.u32 %s638, 4
          %s652 = int_to_ptr.vmem [resolvable:$true] %s651
          %654 = dma.vmem_to_hbm [thread:$0]  %s652, 128, %s649, %s635
        $region36: #{tpu_custom_call.1} parent=31 // pred_fallthru
          _
      $region32: #{tpu_custom_call.1} parent=5 // pred_fallthru
        _
      %p655 = scmp.le.s32.totalorder 2, %s12
      // Predicated region
      $region37: #{tpu_custom_call.1} parent=5 // pred_check
        %p656 = pneg %p655
      $region38: #{tpu_custom_call.1} parent=5 // pred_check_branch
        %658 = sbr.rel (%p656) target = $region40
      $region39: #{tpu_custom_call.1} parent=5 // pred_region
        %s659 = ssub.s32 %s12, 2
        // Predicated region
        $region41: #{tpu_custom_call.1} parent=39 // pred_check
          %p660 = pneg %p135
        $region42: #{tpu_custom_call.1} parent=39 // pred_check_branch
          %662 = sbr.rel (%p660) target = $region44
        $region43: #{tpu_custom_call.1} parent=39 // pred_region
          %s663 = sand.u32 %s120, 1
          %s664 = scalar_lea.sflag [#allocation3], %s663
          %s665 = sand.u32 %s120, 1
          %s666 = smul.addr %s665, 8
          %s667 = scalar_lea.vmem [#allocation2], %s666
          %668 = dma.done %s664, 128
        $region44: #{tpu_custom_call.1} parent=39 // pred_fallthru
          _
      $region40: #{tpu_custom_call.1} parent=5 // pred_fallthru
        _
    $region6: #{tpu_custom_call.1} parent=1 // loop_footer
      %s16 = sadd.s32 1, %s12
    $region7: #{tpu_custom_call.1} parent=1 // loop_footer_branch
      %11 = sbr.rel target = $region3
    $region8: #{tpu_custom_call.1} parent=1 // loop_exit
      _
    %669 = vsyncpa [#allocation3], 1
    %s670 = scalar_lea.sflag [#allocation3], 1
    %671 = vsyncpa %s670, 1

</llo_original>
